<compile_context>
chip_gen: v6e
topology: v6e:2x2x1
jax: 0.10.0
libtpu: 0.0.40
codegen_flags: <defaults>
</compile_context>

<pallas_src>
import functools
import math

import jax
import jax.numpy as jnp
from jax import lax
from jax.experimental import pallas as pl
from jax.experimental.pallas import tpu as pltpu


# ---------------------------------------------------------------------------
# Generation-aware VMEM / tile planning
# ---------------------------------------------------------------------------
def _vmem_capacity_bytes():
    try:
        return int(pltpu.get_tpu_info().vmem_capacity_bytes)
    except Exception:
        return 64 * 1024 * 1024  # conservative fallback (v7x per-TensorCore)


def _round_up(x, mult):
    return ((x + mult - 1) // mult) * mult


def _plan_tiles(m, k, feat_itemsize):
    """Choose the K tile size, padded K and vmem_limit for the Gram kernels.

    Budget ~40% of physical VMEM for kernel buffers (rest is headroom /
    compiler scratch): resident f32 (m, m) blocks (accumulator + the
    double-buffered target/output block) are charged as fixed cost, then the
    double-buffered (m, tk) feature tile takes the largest 128-aligned tk
    that still fits.
    """
    cap = _vmem_capacity_bytes()
    budget = int(cap * 0.4)
    fixed = 3 * m * m * 4                      # acc + 2x (m, m) f32 block
    per_tk = 2 * m * feat_itemsize             # double-buffered (m, tk) tile
    avail = max(budget - fixed, 128 * per_tk)  # always allow at least tk=128
    tk = max(128, (avail // per_tk) // 128 * 128)
    tk = min(tk, _round_up(k, 128))
    nk = -(-k // tk)                           # ceil-div
    padded_k = nk * tk                         # zero-pad tail (Gram unchanged)
    needed = fixed + per_tk * tk + (1 << 20)
    vmem_limit = int(min(cap * 0.9, max(2 * needed, 32 * 1024 * 1024)))
    return tk, nk, padded_k, vmem_limit


def _auto_precision(dtype, precision):
    if precision is not None:
        return precision
    # f32 operands: pin HIGHEST so results track an f32 reference (otherwise
    # the MXU default is a single reduced-precision bf16 pass).  bf16 (or
    # other sub-32-bit) operands are MXU-native: no override.
    return lax.Precision.HIGHEST if dtype == jnp.float32 else None


# ---------------------------------------------------------------------------
# Kernels
# ---------------------------------------------------------------------------
def _gram_accumulate(acc_ref, f, k_step, precision):
    """acc (f32) (+)= f @ f.T for the current K tile.

    The ((1,),(1,)) contraction is MXU-native (same form as 'bqd,bkd->bqk' in
    the canonical flash-attention kernel) -- no XLU transpose of the tile.
    """
    p = lax.dot_general(
        f, f,
        dimension_numbers=(((1,), (1,)), ((), ())),
        precision=precision,
        preferred_element_type=jnp.float32,
    )

    @pl.when(k_step == 0)
    def _():
        acc_ref[...] = p          # direct write: no M^2 zero-fill + add pass

    @pl.when(k_step > 0)
    def _():
        acc_ref[...] += p


def _gram_kernel(f_ref, g_ref, *, inv_norm, precision):
    """G += F_tile @ F_tile^T over the K grid axis; scale at the end.

    f_ref : (M, tk) feature tile in VMEM (native dtype)
    g_ref : (M, M) f32 output Gram matrix (resident across the K axis)
    """
    k_step = pl.program_id(0)
    _gram_accumulate(g_ref, f_ref[...], k_step, precision)

    @pl.when(k_step == pl.num_programs(0) - 1)
    def _():
        g_ref[...] *= inv_norm


def _style_loss_kernel(mul_ref, f_ref, tgt_ref, loss_ref, acc_ref,
                       *, inv_norm, inv_mm, precision):
    """Gram of F (K-tiled) fused with MSE vs. (target * mul); scalar-only output.

    mul_ref : (1,) float32 in SMEM   (self.target_mul)
    f_ref   : (M, tk) feature tile in VMEM (native dtype)
    tgt_ref : (M, M) f32 target Gram in VMEM (block constant over the grid)
    loss_ref: (1, 1) f32 output scalar loss
    acc_ref : (M, M) f32 VMEM scratch accumulator (never written to HBM)
    """
    k_step = pl.program_id(0)
    _gram_accumulate(acc_ref, f_ref[...], k_step, precision)

    @pl.when(k_step == pl.num_programs(0) - 1)
    def _():
        g = acc_ref[...] * inv_norm
        diff = g - tgt_ref[...] * mul_ref[0]
        loss_ref[0, 0] = jnp.sum(diff * diff) * inv_mm


# ---------------------------------------------------------------------------
# Wrappers
# ---------------------------------------------------------------------------
def gram_matrix(x, precision=None):
    """Pallas Gram matrix of an NCHW tensor, matching StyleLoss.gram_matrix."""
    n, c, h, w = x.shape
    m, k = n * c, h * w
    inv_norm = 1.0 / math.sqrt(float(n * c * h * w))
    feats = x.reshape(m, k)                     # native dtype; no f32 up-cast
    tk, nk, padded_k, vmem_limit = _plan_tiles(m, k, feats.dtype.itemsize)
    if padded_k != k:
        feats = jnp.pad(feats, ((0, 0), (0, padded_k - k)))
    return pl.pallas_call(
        functools.partial(_gram_kernel, inv_norm=inv_norm,
                          precision=_auto_precision(feats.dtype, precision)),
        out_shape=jax.ShapeDtypeStruct((m, m), jnp.float32),
        grid=(nk,),
        in_specs=[pl.BlockSpec((m, tk), lambda kk: (0, kk))],
        out_specs=pl.BlockSpec((m, m), lambda kk: (0, 0)),
        compiler_params=pltpu.CompilerParams(
            dimension_semantics=("arbitrary",),
            vmem_limit_bytes=vmem_limit),
    )(feats)


def _style_loss_call(x, target_gram, target_mul, precision=None):
    n, c, h, w = x.shape
    m, k = n * c, h * w
    inv_norm = 1.0 / math.sqrt(float(n * c * h * w))
    inv_mm = 1.0 / float(m * m)
    feats = x.reshape(m, k)                     # native dtype; no f32 up-cast
    tk, nk, padded_k, vmem_limit = _plan_tiles(m, k, feats.dtype.itemsize)
    if padded_k != k:
        feats = jnp.pad(feats, ((0, 0), (0, padded_k - k)))
    mul = jnp.asarray([target_mul], dtype=jnp.float32)
    loss = pl.pallas_call(
        functools.partial(_style_loss_kernel, inv_norm=inv_norm, inv_mm=inv_mm,
                          precision=_auto_precision(feats.dtype, precision)),
        out_shape=jax.ShapeDtypeStruct((1, 1), jnp.float32),
        grid=(nk,),
        in_specs=[
            pl.BlockSpec(memory_space=pltpu.MemorySpace.SMEM),   # target_mul
            pl.BlockSpec((m, tk), lambda kk: (0, kk)),           # features
            pl.BlockSpec((m, m), lambda kk: (0, 0)),             # target Gram
        ],
        out_specs=pl.BlockSpec((1, 1), lambda kk: (0, 0)),       # scalar loss
        scratch_shapes=[pltpu.VMEM((m, m), jnp.float32)],        # accumulator
        compiler_params=pltpu.CompilerParams(
            dimension_semantics=("arbitrary",),
            vmem_limit_bytes=vmem_limit),
    )(mul, feats, target_gram)
    return loss[0, 0]


class StyleLoss:
    """JAX/Pallas port of the PyTorch StyleLoss module (forward only)."""

    def __init__(self, target_feature):
        # self.target = gram_matrix(target_feature).detach()
        self.target = gram_matrix(target_feature)
        self.target_mul = 1.0
        self.loss = None

    def set_target_mul(self, mul: float):
        self.target_mul = float(mul)

    def __call__(self, x):
        self.loss = _style_loss_call(x, self.target, self.target_mul)
        return x  # forward returns the input unchanged (transparent layer)


# ---------------------------------------------------------------------------
# Main
# ---------------------------------------------------------------------------
if __name__ == "__main__":
    key = jax.random.PRNGKey(0)
    k_tgt, k_in = jax.random.split(key)

    def ref_gram(t):
        a, b, c, d = t.shape
        f = t.reshape(a * b, c * d).astype(jnp.float32)
        g = jnp.matmul(f, f.T, precision=lax.Precision.HIGHEST)
        return g / math.sqrt(float(a * b * c * d))

    def ref_loss(xx, tt, mul):
        return jnp.mean((ref_gram(xx) - ref_gram(tt) * mul) ** 2)

    # --- Case 1: f32 activations (exact HIGHEST-precision path) -------------
    N, C, H, W = 2, 4, 16, 16
    target_feature = jax.random.normal(k_tgt, (N, C, H, W), dtype=jnp.float32)
    x = jax.random.normal(k_in, (N, C, H, W), dtype=jnp.float32)

    module = StyleLoss(target_feature)
    module.set_target_mul(0.5)
    out = jax.block_until_ready(module(x))
    loss = jax.block_until_ready(module.loss)

    assert out.shape == x.shape and bool(jnp.all(out == x))
    ref1 = ref_loss(x, target_feature, 0.5)
    assert jnp.allclose(loss, ref1, rtol=1e-5, atol=1e-6), (loss, ref1)

    # --- Case 2: bf16 activations streamed natively (no wrapper up-cast),
    #     K = 100 (not 128-divisible) exercises the zero-padding path. -------
    N2, C2, H2, W2 = 1, 16, 10, 10
    tgt2 = jax.random.normal(k_tgt, (N2, C2, H2, W2)).astype(jnp.bfloat16)
    x2 = jax.random.normal(k_in, (N2, C2, H2, W2)).astype(jnp.bfloat16)

    mod2 = StyleLoss(tgt2)          # target_mul defaults to 1.0
    out2 = jax.block_until_ready(mod2(x2))
    loss2 = jax.block_until_ready(mod2.loss)

    assert out2.shape == x2.shape
    ref2 = ref_loss(x2, tgt2, 1.0)
    assert jnp.allclose(loss2, ref2, rtol=1e-1, atol=1e-3), (loss2, ref2)

    print("KERNEL_OK")
</pallas_src>

<mosaic_0001>
module attributes {stable_mosaic.version = 11 : i64} {
  func.func @_gram_kernel(%arg0: i32, %arg1: memref<8x256xf32, #tpu.memory_space<vmem>>, %arg2: memref<8x8xf32, #tpu.memory_space<vmem>>) attributes {dimension_semantics = [#tpu.dimension_semantics<arbitrary>], iteration_bounds = array<i64: 1>, scalar_prefetch = 0 : i64, scratch_operands = 0 : i64, tpu.core_type = #tpu.core_type<tc>, window_params = [{transform_indices = @transform_0, window_bounds = array<i64: 8, 256>}, {pipeline_mode = #tpu.pipeline_mode<synchronous>, transform_indices = @transform_1, window_bounds = array<i64: 8, 8>}]} {
    %c0 = arith.constant 0 : index
    %c0_0 = arith.constant 0 : index
    %0 = vector.load %arg1[%c0, %c0_0] : memref<8x256xf32, #tpu.memory_space<vmem>>, vector<8x256xf32>
    %cst = arith.constant dense<0.000000e+00> : vector<8x8xf32>
    %1 = tpu.matmul %0, %0, %cst {dimension_numbers = #tpu.dot_dimension_numbers<[1], [1], [0], [0], [0, 0, 1, 0], [], []>, precision = #tpu.contract_precision<fp32>} : vector<8x256xf32>, vector<8x256xf32>, vector<8x8xf32> -> vector<8x8xf32>
    %c0_i32 = arith.constant 0 : i32
    %2 = arith.cmpi eq, %arg0, %c0_i32 : i32
    %3 = arith.extui %2 : i1 to i32
    %c0_i32_1 = arith.constant 0 : i32
    %4 = arith.cmpi ne, %3, %c0_i32_1 : i32
    scf.if %4 {
      %c0_6 = arith.constant 0 : index
      %c0_7 = arith.constant 0 : index
      %11 = vector.load %arg2[%c0_6, %c0_7] : memref<8x8xf32, #tpu.memory_space<vmem>>, vector<8x8xf32>
      tpu.vector_store %arg2[%c0_6, %c0_7], %1 {strides = array<i32>} : memref<8x8xf32, #tpu.memory_space<vmem>>, vector<8x8xf32>,
    } else {
    }
    %c0_i32_2 = arith.constant 0 : i32
    %5 = arith.cmpi sgt, %arg0, %c0_i32_2 : i32
    %6 = arith.extui %5 : i1 to i32
    %c0_i32_3 = arith.constant 0 : i32
    %7 = arith.cmpi ne, %6, %c0_i32_3 : i32
    scf.if %7 {
      %c0_6 = arith.constant 0 : index
      %c0_7 = arith.constant 0 : index
      %11 = vector.load %arg2[%c0_6, %c0_7] : memref<8x8xf32, #tpu.memory_space<vmem>>, vector<8x8xf32>
      %12 = arith.addf %11, %1 : vector<8x8xf32>
      %c0_8 = arith.constant 0 : index
      %c0_9 = arith.constant 0 : index
      %13 = vector.load %arg2[%c0_8, %c0_9] : memref<8x8xf32, #tpu.memory_space<vmem>>, vector<8x8xf32>
      tpu.vector_store %arg2[%c0_8, %c0_9], %12 {strides = array<i32>} : memref<8x8xf32, #tpu.memory_space<vmem>>, vector<8x8xf32>,
    } else {
    }
    %c0_i32_4 = arith.constant 0 : i32
    %8 = arith.cmpi eq, %arg0, %c0_i32_4 : i32
    %9 = arith.extui %8 : i1 to i32
    %c0_i32_5 = arith.constant 0 : i32
    %10 = arith.cmpi ne, %9, %c0_i32_5 : i32
    scf.if %10 {
      %c0_6 = arith.constant 0 : index
      %c0_7 = arith.constant 0 : index
      %11 = vector.load %arg2[%c0_6, %c0_7] : memref<8x8xf32, #tpu.memory_space<vmem>>, vector<8x8xf32>
      %cst_8 = arith.constant 0.0220970865 : f32
      %12 = vector.broadcast %cst_8 : f32 to vector<8x8xf32>
      %13 = arith.mulf %11, %12 : vector<8x8xf32>
      %c0_9 = arith.constant 0 : index
      %c0_10 = arith.constant 0 : index
      %14 = vector.load %arg2[%c0_9, %c0_10] : memref<8x8xf32, #tpu.memory_space<vmem>>, vector<8x8xf32>
      tpu.vector_store %arg2[%c0_9, %c0_10], %13 {strides = array<i32>} : memref<8x8xf32, #tpu.memory_space<vmem>>, vector<8x8xf32>,
    } else {
    }
    return
  }
  func.func @transform_0(%arg0: i32) -> (i32, i32) {
    %c0_i32 = arith.constant 0 : i32
    %c0_i32_0 = arith.constant 0 : i32
    return %c0_i32, %arg0 : i32, i32
  }
  func.func @transform_1(%arg0: i32) -> (i32, i32) {
    %c0_i32 = arith.constant 0 : i32
    %c0_i32_0 = arith.constant 0 : i32
    %c0_i32_1 = arith.constant 0 : i32
    return %c0_i32, %c0_i32_0 : i32, i32
  }
}

</mosaic_0001>

<llo_original>
// kernel: tpu_custom_call.1
$region0: #{tpu_custom_call.1}
  #allocation0 [shape = 'u32[]', space=smem, size = 0x4, offset = 0x4, fixed_abs, tag = 'smem constant byte address 0x4 - core index']
  #allocation1 [shape = 'u32[144,128]{1,0:T(1,128)}', space=vmem, size = 0x12000, scoped, tag = 'internal scratch']
  %s0 = inlined_call_operand.hbm [shape: f32[8,256], index: 0, kind: input, shape index: {}]
  %s1 = inlined_call_operand.hbm [shape: f32[8,8], index: 1, kind: output, shape index: {}]
  %s2 = sld [smem:[#allocation0]]
  $region30: #{tpu_custom_call.1} parent=0
    _
  %s4 = ssub.s32 1, %s2
  %s5 = scalar_select 0, %s4, %s2
  $region1: #{tpu_custom_call.1} parent=0
    #allocation2 [shape = 'u8[8192]{0}', space=vmem, size = 0x2000, scoped, tag = 'input window, operand 0, single buffered']
    #allocation3 [shape = 's32[1]{0}', space=sflag, size = 0x4, scoped, tag = 'scoped memory for tpu_custom_call.1']
    #allocation4 [shape = 's32[1]{0}', space=sflag, size = 0x4, scoped, tag = 'scoped memory for tpu_custom_call.1']
    #allocation5 [shape = 'u8[4096]{0}', space=vmem, size = 0x1000, scoped, tag = 'output window, operand 0, single buffered']
    %6 = vsyncpa [#allocation3], 0
    %7 = vsyncpa [#allocation4], 0
    // Predicated region
    $region2: #{tpu_custom_call.1} parent=1 // pred_check
      _
    $region3: #{tpu_custom_call.1} parent=1 // pred_check_branch
      %9 = sbr.rel (0) target = $region5
    $region4: #{tpu_custom_call.1} parent=1 // pred_region
      %s11 = ssub.s32 256, 256
      %12 = vsyncadd [#allocation3], %s11
      %s14 = sshll.u32 [#allocation2], 4
      %s15 = int_to_ptr.vmem [resolvable:$true] %s14
      %17 = dma.hbm_to_vmem [thread:$0]  %s0, 256, %s15, [#allocation3]
    $region5: #{tpu_custom_call.1} parent=1 // pred_fallthru
      _
    // Predicated region
    $region6: #{tpu_custom_call.1} parent=1 // pred_check
      _
    $region7: #{tpu_custom_call.1} parent=1 // pred_check_branch
      %19 = sbr.rel (0) target = $region9
    $region8: #{tpu_custom_call.1} parent=1 // pred_region
      %20 = dma.done [#allocation3], 256
    $region9: #{tpu_custom_call.1} parent=1 // pred_fallthru
      _
    %v21 = vld [vmem:[#allocation2] sm:$0xff]
    %v22 = vld [vmem:[#allocation2 + $0x8] sm:$0xff]
    %23 = vmatprep.subr.mxu0 0.0
    %24 = vmatpush1.xpose.msra.mxu0 0.0
    %25 = vmatprep.subr.mxu0 0.0
    %26 = vmatpush1.xpose.msra.mxu0 0.0
    %27 = vmatprep.subr.mxu0 0.0
    %28 = vmatpush1.xpose.msra.mxu0 0.0
    %29 = vmatprep.subr.mxu0 0.0
    %30 = vmatpush1.xpose.msra.mxu0 0.0
    %31 = vmatprep.subr.mxu0 0.0
    %32 = vmatpush1.xpose.msra.mxu0 0.0
    %33 = vmatprep.subr.mxu0 0.0
    %34 = vmatpush1.xpose.msra.mxu0 0.0
    %35 = vmatprep.subr.mxu0 0.0
    %36 = vmatpush1.xpose.msra.mxu0 0.0
    %37 = vmatprep.subr.mxu0 0.0
    %38 = vmatpush1.xpose.msra.mxu0 0.0
    %39 = vmatprep.subr.mxu0 0.0
    %40 = vmatpush1.xpose.msra.mxu0 0.0
    %41 = vmatprep.subr.mxu0 0.0
    %42 = vmatpush1.xpose.msra.mxu0 0.0
    %43 = vmatprep.subr.mxu0 0.0
    %44 = vmatpush1.xpose.msra.mxu0 0.0
    %45 = vmatprep.subr.mxu0 0.0
    %46 = vmatpush1.xpose.msra.mxu0 0.0
    %47 = vmatprep.subr.mxu0 0.0
    %48 = vmatpush1.xpose.msra.mxu0 0.0
    %49 = vmatprep.subr.mxu0 0.0
    %50 = vmatpush1.xpose.msra.mxu0 0.0
    %51 = vmatprep.subr.mxu0 0.0
    %52 = vmatpush1.xpose.msra.mxu0 0.0
    %v53 = vand.u32 %v22, 4294901760
    %54 = vmatprep.subr.mxu0 %v53
    %v55 = vand.u32 %v21, 4294901760
    %56 = vmatpush1.xpose.msra.mxu0 %v55
    %57 = vmatprep.subr.mxu0 0.0
    %58 = vmatpush2.xpose.msra.mxu0 0.0
    %59 = vmatprep.subr.mxu0 0.0
    %60 = vmatpush2.xpose.msra.mxu0 0.0
    %61 = vmatprep.subr.mxu0 0.0
    %62 = vmatpush2.xpose.msra.mxu0 0.0
    %63 = vmatprep.subr.mxu0 0.0
    %64 = vmatpush2.xpose.msra.mxu0 0.0
    %65 = vmatprep.subr.mxu0 0.0
    %66 = vmatpush2.xpose.msra.mxu0 0.0
    %67 = vmatprep.subr.mxu0 0.0
    %68 = vmatpush2.xpose.msra.mxu0 0.0
    %69 = vmatprep.subr.mxu0 0.0
    %70 = vmatpush2.xpose.msra.mxu0 0.0
    %71 = vmatprep.subr.mxu0 0.0
    %72 = vmatpush2.xpose.msra.mxu0 0.0
    %73 = vmatprep.subr.mxu0 0.0
    %74 = vmatpush2.xpose.msra.mxu0 0.0
    %75 = vmatprep.subr.mxu0 0.0
    %76 = vmatpush2.xpose.msra.mxu0 0.0
    %77 = vmatprep.subr.mxu0 0.0
    %78 = vmatpush2.xpose.msra.mxu0 0.0
    %79 = vmatprep.subr.mxu0 0.0
    %80 = vmatpush2.xpose.msra.mxu0 0.0
    %81 = vmatprep.subr.mxu0 0.0
    %82 = vmatpush2.xpose.msra.mxu0 0.0
    %83 = vmatprep.subr.mxu0 0.0
    %84 = vmatpush2.xpose.msra.mxu0 0.0
    %85 = vmatprep.subr.mxu0 0.0
    %86 = vmatpush2.xpose.msra.mxu0 0.0
    %87 = vmatprep.subr.mxu0 0.0
    %88 = vmatpush2.xpose.msra.mxu0 0.0
    %v89 = vand.u32 %v22, 4294901760
    %v90 = vsub.f32 %v22, %v89
    %v91 = vand.u32 %v90, 4294901760
    %v92 = vsub.f32 %v90, %v91
    %v93 = vand.u32 %v92, 4294901760
    %94 = vmatprep.mubr.f32.mxu0 %v93
    %v95 = vand.u32 %v21, 4294901760
    %v96 = vsub.f32 %v21, %v95
    %v97 = vand.u32 %v96, 4294901760
    %v98 = vsub.f32 %v96, %v97
    %v99 = vand.u32 %v98, 4294901760
    %100 = vmatmul.mubr.f32.gmra.mxu0 %v99
    %v101 = vpop.f32.mrf.mxu0
    %v102 = vadd.f32 0.0, %v101
    %v103 = vpop.f32.mrf.mxu0
    %104 = vdwg.mxu0
    %105 = vmatprep.subr.mxu0 0.0
    %106 = vmatpush1.xpose.msra.mxu0 0.0
    %107 = vmatprep.subr.mxu0 0.0
    %108 = vmatpush1.xpose.msra.mxu0 0.0
    %109 = vmatprep.subr.mxu0 0.0
    %110 = vmatpush1.xpose.msra.mxu0 0.0
    %111 = vmatprep.subr.mxu0 0.0
    %112 = vmatpush1.xpose.msra.mxu0 0.0
    %113 = vmatprep.subr.mxu0 0.0
    %114 = vmatpush1.xpose.msra.mxu0 0.0
    %115 = vmatprep.subr.mxu0 0.0
    %116 = vmatpush1.xpose.msra.mxu0 0.0
    %117 = vmatprep.subr.mxu0 0.0
    %118 = vmatpush1.xpose.msra.mxu0 0.0
    %119 = vmatprep.subr.mxu0 0.0
    %120 = vmatpush1.xpose.msra.mxu0 0.0
    %121 = vmatprep.subr.mxu0 0.0
    %122 = vmatpush1.xpose.msra.mxu0 0.0
    %123 = vmatprep.subr.mxu0 0.0
    %124 = vmatpush1.xpose.msra.mxu0 0.0
    %125 = vmatprep.subr.mxu0 0.0
    %126 = vmatpush1.xpose.msra.mxu0 0.0
    %127 = vmatprep.subr.mxu0 0.0
    %128 = vmatpush1.xpose.msra.mxu0 0.0
    %129 = vmatprep.subr.mxu0 0.0
    %130 = vmatpush1.xpose.msra.mxu0 0.0
    %131 = vmatprep.subr.mxu0 0.0
    %132 = vmatpush1.xpose.msra.mxu0 0.0
    %133 = vmatprep.subr.mxu0 0.0
    %134 = vmatpush1.xpose.msra.mxu0 0.0
    %v135 = vand.u32 %v22, 4294901760
    %v136 = vsub.f32 %v22, %v135
    %v137 = vand.u32 %v136, 4294901760
    %v138 = vsub.f32 %v136, %v137
    %v139 = vand.u32 %v138, 4294901760
    %140 = vmatprep.subr.mxu0 %v139
    %v141 = vand.u32 %v21, 4294901760
    %v142 = vsub.f32 %v21, %v141
    %v143 = vand.u32 %v142, 4294901760
    %v144 = vsub.f32 %v142, %v143
    %v145 = vand.u32 %v144, 4294901760
    %146 = vmatpush1.xpose.msra.mxu0 %v145
    %147 = vmatprep.subr.mxu0 0.0
    %148 = vmatpush2.xpose.msra.mxu0 0.0
    %149 = vmatprep.subr.mxu0 0.0
    %150 = vmatpush2.xpose.msra.mxu0 0.0
    %151 = vmatprep.subr.mxu0 0.0
    %152 = vmatpush2.xpose.msra.mxu0 0.0
    %153 = vmatprep.subr.mxu0 0.0
    %154 = vmatpush2.xpose.msra.mxu0 0.0
    %155 = vmatprep.subr.mxu0 0.0
    %156 = vmatpush2.xpose.msra.mxu0 0.0
    %157 = vmatprep.subr.mxu0 0.0
    %158 = vmatpush2.xpose.msra.mxu0 0.0
    %159 = vmatprep.subr.mxu0 0.0
    %160 = vmatpush2.xpose.msra.mxu0 0.0
    %161 = vmatprep.subr.mxu0 0.0
    %162 = vmatpush2.xpose.msra.mxu0 0.0
    %163 = vmatprep.subr.mxu0 0.0
    %164 = vmatpush2.xpose.msra.mxu0 0.0
    %165 = vmatprep.subr.mxu0 0.0
    %166 = vmatpush2.xpose.msra.mxu0 0.0
    %167 = vmatprep.subr.mxu0 0.0
    %168 = vmatpush2.xpose.msra.mxu0 0.0
    %169 = vmatprep.subr.mxu0 0.0
    %170 = vmatpush2.xpose.msra.mxu0 0.0
    %171 = vmatprep.subr.mxu0 0.0
    %172 = vmatpush2.xpose.msra.mxu0 0.0
    %173 = vmatprep.subr.mxu0 0.0
    %174 = vmatpush2.xpose.msra.mxu0 0.0
    %175 = vmatprep.subr.mxu0 0.0
    %176 = vmatpush2.xpose.msra.mxu0 0.0
    %177 = vmatprep.subr.mxu0 0.0
    %178 = vmatpush2.xpose.msra.mxu0 0.0
    %v179 = vand.u32 %v22, 4294901760
    %180 = vmatprep.mubr.f32.mxu0 %v179
    %v181 = vand.u32 %v21, 4294901760
    %182 = vmatmul.mubr.f32.gmra.mxu0 %v181
    %v183 = vpop.f32.mrf.mxu0
    %v184 = vadd.f32 %v102, %v183
    %v185 = vpop.f32.mrf.mxu0
    %186 = vdwg.mxu0
    %187 = vmatprep.subr.mxu0 0.0
    %188 = vmatpush1.xpose.msra.mxu0 0.0
    %189 = vmatprep.subr.mxu0 0.0
    %190 = vmatpush1.xpose.msra.mxu0 0.0
    %191 = vmatprep.subr.mxu0 0.0
    %192 = vmatpush1.xpose.msra.mxu0 0.0
    %193 = vmatprep.subr.mxu0 0.0
    %194 = vmatpush1.xpose.msra.mxu0 0.0
    %195 = vmatprep.subr.mxu0 0.0
    %196 = vmatpush1.xpose.msra.mxu0 0.0
    %197 = vmatprep.subr.mxu0 0.0
    %198 = vmatpush1.xpose.msra.mxu0 0.0
    %199 = vmatprep.subr.mxu0 0.0
    %200 = vmatpush1.xpose.msra.mxu0 0.0
    %201 = vmatprep.subr.mxu0 0.0
    %202 = vmatpush1.xpose.msra.mxu0 0.0
    %203 = vmatprep.subr.mxu0 0.0
    %204 = vmatpush1.xpose.msra.mxu0 0.0
    %205 = vmatprep.subr.mxu0 0.0
    %206 = vmatpush1.xpose.msra.mxu0 0.0
    %207 = vmatprep.subr.mxu0 0.0
    %208 = vmatpush1.xpose.msra.mxu0 0.0
    %209 = vmatprep.subr.mxu0 0.0
    %210 = vmatpush1.xpose.msra.mxu0 0.0
    %211 = vmatprep.subr.mxu0 0.0
    %212 = vmatpush1.xpose.msra.mxu0 0.0
    %213 = vmatprep.subr.mxu0 0.0
    %214 = vmatpush1.xpose.msra.mxu0 0.0
    %215 = vmatprep.subr.mxu0 0.0
    %216 = vmatpush1.xpose.msra.mxu0 0.0
    %v217 = vand.u32 %v22, 4294901760
    %v218 = vsub.f32 %v22, %v217
    %219 = vmatprep.subr.mxu0 %v218
    %v220 = vand.u32 %v21, 4294901760
    %v221 = vsub.f32 %v21, %v220
    %222 = vmatpush1.xpose.msra.mxu0 %v221
    %223 = vmatprep.subr.mxu0 0.0
    %224 = vmatpush2.xpose.msra.mxu0 0.0
    %225 = vmatprep.subr.mxu0 0.0
    %226 = vmatpush2.xpose.msra.mxu0 0.0
    %227 = vmatprep.subr.mxu0 0.0
    %228 = vmatpush2.xpose.msra.mxu0 0.0
    %229 = vmatprep.subr.mxu0 0.0
    %230 = vmatpush2.xpose.msra.mxu0 0.0
    %231 = vmatprep.subr.mxu0 0.0
    %232 = vmatpush2.xpose.msra.mxu0 0.0
    %233 = vmatprep.subr.mxu0 0.0
    %234 = vmatpush2.xpose.msra.mxu0 0.0
    %235 = vmatprep.subr.mxu0 0.0
    %236 = vmatpush2.xpose.msra.mxu0 0.0
    %237 = vmatprep.subr.mxu0 0.0
    %238 = vmatpush2.xpose.msra.mxu0 0.0
    %239 = vmatprep.subr.mxu0 0.0
    %240 = vmatpush2.xpose.msra.mxu0 0.0
    %241 = vmatprep.subr.mxu0 0.0
    %242 = vmatpush2.xpose.msra.mxu0 0.0
    %243 = vmatprep.subr.mxu0 0.0
    %244 = vmatpush2.xpose.msra.mxu0 0.0
    %245 = vmatprep.subr.mxu0 0.0
    %246 = vmatpush2.xpose.msra.mxu0 0.0
    %247 = vmatprep.subr.mxu0 0.0
    %248 = vmatpush2.xpose.msra.mxu0 0.0
    %249 = vmatprep.subr.mxu0 0.0
    %250 = vmatpush2.xpose.msra.mxu0 0.0
    %251 = vmatprep.subr.mxu0 0.0
    %252 = vmatpush2.xpose.msra.mxu0 0.0
    %253 = vmatprep.subr.mxu0 0.0
    %254 = vmatpush2.xpose.msra.mxu0 0.0
    %v255 = vand.u32 %v22, 4294901760
    %v256 = vsub.f32 %v22, %v255
    %257 = vmatprep.mubr.f32.mxu0 %v256
    %v258 = vand.u32 %v21, 4294901760
    %v259 = vsub.f32 %v21, %v258
    %260 = vmatmul.mubr.f32.gmra.mxu0 %v259
    %v261 = vpop.f32.mrf.mxu0
    %v262 = vadd.f32 %v184, %v261
    %v263 = vpop.f32.mrf.mxu0
    %264 = vdwg.mxu0
    %265 = vmatprep.subr.mxu0 0.0
    %266 = vmatpush1.xpose.msra.mxu0 0.0
    %267 = vmatprep.subr.mxu0 0.0
    %268 = vmatpush1.xpose.msra.mxu0 0.0
    %269 = vmatprep.subr.mxu0 0.0
    %270 = vmatpush1.xpose.msra.mxu0 0.0
    %271 = vmatprep.subr.mxu0 0.0
    %272 = vmatpush1.xpose.msra.mxu0 0.0
    %273 = vmatprep.subr.mxu0 0.0
    %274 = vmatpush1.xpose.msra.mxu0 0.0
    %275 = vmatprep.subr.mxu0 0.0
    %276 = vmatpush1.xpose.msra.mxu0 0.0
    %277 = vmatprep.subr.mxu0 0.0
    %278 = vmatpush1.xpose.msra.mxu0 0.0
    %279 = vmatprep.subr.mxu0 0.0
    %280 = vmatpush1.xpose.msra.mxu0 0.0
    %281 = vmatprep.subr.mxu0 0.0
    %282 = vmatpush1.xpose.msra.mxu0 0.0
    %283 = vmatprep.subr.mxu0 0.0
    %284 = vmatpush1.xpose.msra.mxu0 0.0
    %285 = vmatprep.subr.mxu0 0.0
    %286 = vmatpush1.xpose.msra.mxu0 0.0
    %287 = vmatprep.subr.mxu0 0.0
    %288 = vmatpush1.xpose.msra.mxu0 0.0
    %289 = vmatprep.subr.mxu0 0.0
    %290 = vmatpush1.xpose.msra.mxu0 0.0
    %291 = vmatprep.subr.mxu0 0.0
    %292 = vmatpush1.xpose.msra.mxu0 0.0
    %293 = vmatprep.subr.mxu0 0.0
    %294 = vmatpush1.xpose.msra.mxu0 0.0
    %v295 = vand.u32 %v22, 4294901760
    %296 = vmatprep.subr.mxu0 %v295
    %v297 = vand.u32 %v21, 4294901760
    %298 = vmatpush1.xpose.msra.mxu0 %v297
    %299 = vmatprep.subr.mxu0 0.0
    %300 = vmatpush2.xpose.msra.mxu0 0.0
    %301 = vmatprep.subr.mxu0 0.0
    %302 = vmatpush2.xpose.msra.mxu0 0.0
    %303 = vmatprep.subr.mxu0 0.0
    %304 = vmatpush2.xpose.msra.mxu0 0.0
    %305 = vmatprep.subr.mxu0 0.0
    %306 = vmatpush2.xpose.msra.mxu0 0.0
    %307 = vmatprep.subr.mxu0 0.0
    %308 = vmatpush2.xpose.msra.mxu0 0.0
    %309 = vmatprep.subr.mxu0 0.0
    %310 = vmatpush2.xpose.msra.mxu0 0.0
    %311 = vmatprep.subr.mxu0 0.0
    %312 = vmatpush2.xpose.msra.mxu0 0.0
    %313 = vmatprep.subr.mxu0 0.0
    %314 = vmatpush2.xpose.msra.mxu0 0.0
    %315 = vmatprep.subr.mxu0 0.0
    %316 = vmatpush2.xpose.msra.mxu0 0.0
    %317 = vmatprep.subr.mxu0 0.0
    %318 = vmatpush2.xpose.msra.mxu0 0.0
    %319 = vmatprep.subr.mxu0 0.0
    %320 = vmatpush2.xpose.msra.mxu0 0.0
    %321 = vmatprep.subr.mxu0 0.0
    %322 = vmatpush2.xpose.msra.mxu0 0.0
    %323 = vmatprep.subr.mxu0 0.0
    %324 = vmatpush2.xpose.msra.mxu0 0.0
    %325 = vmatprep.subr.mxu0 0.0
    %326 = vmatpush2.xpose.msra.mxu0 0.0
    %327 = vmatprep.subr.mxu0 0.0
    %328 = vmatpush2.xpose.msra.mxu0 0.0
    %329 = vmatprep.subr.mxu0 0.0
    %330 = vmatpush2.xpose.msra.mxu0 0.0
    %v331 = vand.u32 %v22, 4294901760
    %v332 = vsub.f32 %v22, %v331
    %v333 = vand.u32 %v332, 4294901760
    %334 = vmatprep.mubr.f32.mxu0 %v333
    %v335 = vand.u32 %v21, 4294901760
    %v336 = vsub.f32 %v21, %v335
    %v337 = vand.u32 %v336, 4294901760
    %338 = vmatmul.mubr.f32.gmra.mxu0 %v337
    %v339 = vpop.f32.mrf.mxu0
    %v340 = vadd.f32 %v262, %v339
    %v341 = vpop.f32.mrf.mxu0
    %342 = vdwg.mxu0
    %343 = vmatprep.subr.mxu0 0.0
    %344 = vmatpush1.xpose.msra.mxu0 0.0
    %345 = vmatprep.subr.mxu0 0.0
    %346 = vmatpush1.xpose.msra.mxu0 0.0
    %347 = vmatprep.subr.mxu0 0.0
    %348 = vmatpush1.xpose.msra.mxu0 0.0
    %349 = vmatprep.subr.mxu0 0.0
    %350 = vmatpush1.xpose.msra.mxu0 0.0
    %351 = vmatprep.subr.mxu0 0.0
    %352 = vmatpush1.xpose.msra.mxu0 0.0
    %353 = vmatprep.subr.mxu0 0.0
    %354 = vmatpush1.xpose.msra.mxu0 0.0
    %355 = vmatprep.subr.mxu0 0.0
    %356 = vmatpush1.xpose.msra.mxu0 0.0
    %357 = vmatprep.subr.mxu0 0.0
    %358 = vmatpush1.xpose.msra.mxu0 0.0
    %359 = vmatprep.subr.mxu0 0.0
    %360 = vmatpush1.xpose.msra.mxu0 0.0
    %361 = vmatprep.subr.mxu0 0.0
    %362 = vmatpush1.xpose.msra.mxu0 0.0
    %363 = vmatprep.subr.mxu0 0.0
    %364 = vmatpush1.xpose.msra.mxu0 0.0
    %365 = vmatprep.subr.mxu0 0.0
    %366 = vmatpush1.xpose.msra.mxu0 0.0
    %367 = vmatprep.subr.mxu0 0.0
    %368 = vmatpush1.xpose.msra.mxu0 0.0
    %369 = vmatprep.subr.mxu0 0.0
    %370 = vmatpush1.xpose.msra.mxu0 0.0
    %371 = vmatprep.subr.mxu0 0.0
    %372 = vmatpush1.xpose.msra.mxu0 0.0
    %v373 = vand.u32 %v22, 4294901760
    %v374 = vsub.f32 %v22, %v373
    %v375 = vand.u32 %v374, 4294901760
    %376 = vmatprep.subr.mxu0 %v375
    %v377 = vand.u32 %v21, 4294901760
    %v378 = vsub.f32 %v21, %v377
    %v379 = vand.u32 %v378, 4294901760
    %380 = vmatpush1.xpose.msra.mxu0 %v379
    %381 = vmatprep.subr.mxu0 0.0
    %382 = vmatpush2.xpose.msra.mxu0 0.0
    %383 = vmatprep.subr.mxu0 0.0
    %384 = vmatpush2.xpose.msra.mxu0 0.0
    %385 = vmatprep.subr.mxu0 0.0
    %386 = vmatpush2.xpose.msra.mxu0 0.0
    %387 = vmatprep.subr.mxu0 0.0
    %388 = vmatpush2.xpose.msra.mxu0 0.0
    %389 = vmatprep.subr.mxu0 0.0
    %390 = vmatpush2.xpose.msra.mxu0 0.0
    %391 = vmatprep.subr.mxu0 0.0
    %392 = vmatpush2.xpose.msra.mxu0 0.0
    %393 = vmatprep.subr.mxu0 0.0
    %394 = vmatpush2.xpose.msra.mxu0 0.0
    %395 = vmatprep.subr.mxu0 0.0
    %396 = vmatpush2.xpose.msra.mxu0 0.0
    %397 = vmatprep.subr.mxu0 0.0
    %398 = vmatpush2.xpose.msra.mxu0 0.0
    %399 = vmatprep.subr.mxu0 0.0
    %400 = vmatpush2.xpose.msra.mxu0 0.0
    %401 = vmatprep.subr.mxu0 0.0
    %402 = vmatpush2.xpose.msra.mxu0 0.0
    %403 = vmatprep.subr.mxu0 0.0
    %404 = vmatpush2.xpose.msra.mxu0 0.0
    %405 = vmatprep.subr.mxu0 0.0
    %406 = vmatpush2.xpose.msra.mxu0 0.0
    %407 = vmatprep.subr.mxu0 0.0
    %408 = vmatpush2.xpose.msra.mxu0 0.0
    %409 = vmatprep.subr.mxu0 0.0
    %410 = vmatpush2.xpose.msra.mxu0 0.0
    %411 = vmatprep.subr.mxu0 0.0
    %412 = vmatpush2.xpose.msra.mxu0 0.0
    %v413 = vand.u32 %v22, 4294901760
    %414 = vmatprep.mubr.f32.mxu0 %v413
    %v415 = vand.u32 %v21, 4294901760
    %416 = vmatmul.mubr.f32.gmra.mxu0 %v415
    %v417 = vpop.f32.mrf.mxu0
    %v418 = vadd.f32 %v340, %v417
    %v419 = vpop.f32.mrf.mxu0
    %420 = vdwg.mxu0
    %421 = vmatprep.subr.mxu0 0.0
    %422 = vmatpush1.xpose.msra.mxu0 0.0
    %423 = vmatprep.subr.mxu0 0.0
    %424 = vmatpush1.xpose.msra.mxu0 0.0
    %425 = vmatprep.subr.mxu0 0.0
    %426 = vmatpush1.xpose.msra.mxu0 0.0
    %427 = vmatprep.subr.mxu0 0.0
    %428 = vmatpush1.xpose.msra.mxu0 0.0
    %429 = vmatprep.subr.mxu0 0.0
    %430 = vmatpush1.xpose.msra.mxu0 0.0
    %431 = vmatprep.subr.mxu0 0.0
    %432 = vmatpush1.xpose.msra.mxu0 0.0
    %433 = vmatprep.subr.mxu0 0.0
    %434 = vmatpush1.xpose.msra.mxu0 0.0
    %435 = vmatprep.subr.mxu0 0.0
    %436 = vmatpush1.xpose.msra.mxu0 0.0
    %437 = vmatprep.subr.mxu0 0.0
    %438 = vmatpush1.xpose.msra.mxu0 0.0
    %439 = vmatprep.subr.mxu0 0.0
    %440 = vmatpush1.xpose.msra.mxu0 0.0
    %441 = vmatprep.subr.mxu0 0.0
    %442 = vmatpush1.xpose.msra.mxu0 0.0
    %443 = vmatprep.subr.mxu0 0.0
    %444 = vmatpush1.xpose.msra.mxu0 0.0
    %445 = vmatprep.subr.mxu0 0.0
    %446 = vmatpush1.xpose.msra.mxu0 0.0
    %447 = vmatprep.subr.mxu0 0.0
    %448 = vmatpush1.xpose.msra.mxu0 0.0
    %449 = vmatprep.subr.mxu0 0.0
    %450 = vmatpush1.xpose.msra.mxu0 0.0
    %v451 = vand.u32 %v22, 4294901760
    %452 = vmatprep.subr.mxu0 %v451
    %v453 = vand.u32 %v21, 4294901760
    %454 = vmatpush1.xpose.msra.mxu0 %v453
    %455 = vmatprep.subr.mxu0 0.0
    %456 = vmatpush2.xpose.msra.mxu0 0.0
    %457 = vmatprep.subr.mxu0 0.0
    %458 = vmatpush2.xpose.msra.mxu0 0.0
    %459 = vmatprep.subr.mxu0 0.0
    %460 = vmatpush2.xpose.msra.mxu0 0.0
    %461 = vmatprep.subr.mxu0 0.0
    %462 = vmatpush2.xpose.msra.mxu0 0.0
    %463 = vmatprep.subr.mxu0 0.0
    %464 = vmatpush2.xpose.msra.mxu0 0.0
    %465 = vmatprep.subr.mxu0 0.0
    %466 = vmatpush2.xpose.msra.mxu0 0.0
    %467 = vmatprep.subr.mxu0 0.0
    %468 = vmatpush2.xpose.msra.mxu0 0.0
    %469 = vmatprep.subr.mxu0 0.0
    %470 = vmatpush2.xpose.msra.mxu0 0.0
    %471 = vmatprep.subr.mxu0 0.0
    %472 = vmatpush2.xpose.msra.mxu0 0.0
    %473 = vmatprep.subr.mxu0 0.0
    %474 = vmatpush2.xpose.msra.mxu0 0.0
    %475 = vmatprep.subr.mxu0 0.0
    %476 = vmatpush2.xpose.msra.mxu0 0.0
    %477 = vmatprep.subr.mxu0 0.0
    %478 = vmatpush2.xpose.msra.mxu0 0.0
    %479 = vmatprep.subr.mxu0 0.0
    %480 = vmatpush2.xpose.msra.mxu0 0.0
    %481 = vmatprep.subr.mxu0 0.0
    %482 = vmatpush2.xpose.msra.mxu0 0.0
    %483 = vmatprep.subr.mxu0 0.0
    %484 = vmatpush2.xpose.msra.mxu0 0.0
    %485 = vmatprep.subr.mxu0 0.0
    %486 = vmatpush2.xpose.msra.mxu0 0.0
    %v487 = vand.u32 %v22, 4294901760
    %488 = vmatprep.mubr.f32.mxu0 %v487
    %v489 = vand.u32 %v21, 4294901760
    %490 = vmatmul.mubr.f32.gmra.mxu0 %v489
    %v491 = vpop.f32.mrf.mxu0
    %v492 = vadd.f32 %v418, %v491
    %v493 = vpop.f32.mrf.mxu0
    %494 = vdwg.mxu0
    %p495 = scmp.eq.s32.totalorder 0, 0
    // Predicated region
    $region10: #{tpu_custom_call.1} parent=1 // pred_check
      %p496 = pneg %p495
    $region11: #{tpu_custom_call.1} parent=1 // pred_check_branch
      %498 = sbr.rel (%p496) target = $region13
    $region12: #{tpu_custom_call.1} parent=1 // pred_region
      %vm499 = vcmask 64512
      %500 = vst.msk [vmem:[#allocation5] sm:$0xff] %vm499, %v492
    $region13: #{tpu_custom_call.1} parent=1 // pred_fallthru
      _
    %p501 = scmp.gt.s32.totalorder 0, 0
    // Predicated region
    $region14: #{tpu_custom_call.1} parent=1 // pred_check
      %p502 = pneg %p501
    $region15: #{tpu_custom_call.1} parent=1 // pred_check_branch
      %504 = sbr.rel (%p502) target = $region17
    $region16: #{tpu_custom_call.1} parent=1 // pred_region
      %v505 = vld [vmem:[#allocation5] sm:$0xff]
      %v506 = vadd.f32 %v505, %v492
      %vm507 = vcmask 64512
      %508 = vst.msk [vmem:[#allocation5] sm:$0xff] %vm507, %v506
    $region17: #{tpu_custom_call.1} parent=1 // pred_fallthru
      _
    // Predicated region
    $region18: #{tpu_custom_call.1} parent=1 // pred_check
      %p509 = pneg %p495
    $region19: #{tpu_custom_call.1} parent=1 // pred_check_branch
      %511 = sbr.rel (%p509) target = $region21
    $region20: #{tpu_custom_call.1} parent=1 // pred_region
      %v512 = vld [vmem:[#allocation5] sm:$0xff]
      %v513 = vmul.f32 %v512, 0.022097087
      %vm514 = vcmask 64512
      %515 = vst.msk [vmem:[#allocation5] sm:$0xff] %vm514, %v513
    $region21: #{tpu_custom_call.1} parent=1 // pred_fallthru
      _
    // Predicated region
    $region22: #{tpu_custom_call.1} parent=1 // pred_check
      _
    $region23: #{tpu_custom_call.1} parent=1 // pred_check_branch
      %517 = sbr.rel (0) target = $region25
    $region24: #{tpu_custom_call.1} parent=1 // pred_region
      %s519 = ssub.s32 128, 128
      %520 = vsyncadd [#allocation4], %s519
      %s522 = sshll.u32 [#allocation5], 4
      %s523 = int_to_ptr.vmem [resolvable:$true] %s522
      %525 = dma.vmem_to_hbm [thread:$0]  %s523, 128, %s1, [#allocation4]
    $region25: #{tpu_custom_call.1} parent=1 // pred_fallthru
      _
    // Predicated region
    $region26: #{tpu_custom_call.1} parent=1 // pred_check
      _
    $region27: #{tpu_custom_call.1} parent=1 // pred_check_branch
      %527 = sbr.rel (0) target = $region29
    $region28: #{tpu_custom_call.1} parent=1 // pred_region
      %528 = dma.done [#allocation4], 128
    $region29: #{tpu_custom_call.1} parent=1 // pred_fallthru
      _
    %529 = vsyncpa [#allocation3], 1
    %530 = vsyncpa [#allocation4], 1

</llo_original>
